<compile_context>
chip_gen: v5e
topology: v5e:2x2
jax: 0.10.0
libtpu: 0.0.40
codegen_flags: <defaults>
</compile_context>

<pallas_src>
import jax
import jax.numpy as jnp
from jax.experimental import pallas as pl
from jax.experimental.pallas import tpu as pltpu


def _transition_kernel(x_ref, scale2_ref, shift2_ref, w_ref, b_ref, o_ref):
    # x_ref:      (1, TH, W/2, 2*Cin) bf16 -- adjacent W columns packed on lanes
    # scale2_ref: (1, 2*Cin) f32  folded BN scale, duplicated for the packing
    # shift2_ref: (1, 2*Cin) f32  folded BN shift, duplicated for the packing
    # w_ref:      (Cin, Cout) bf16  1x1 conv weight as a matmul matrix
    # b_ref:      (1, Cout)  f32    conv bias
    # o_ref:      (1, TH/2, W/2, Cout) f32
    _, TH, WH, C2 = x_ref.shape
    Cin = C2 // 2
    th2 = TH // 2

    x = x_ref[...].astype(jnp.float32)                       # (1, TH, WH, 2Cin)
    scale = scale2_ref[...].astype(jnp.float32).reshape(1, 1, 1, C2)
    shift = shift2_ref[...].astype(jnp.float32).reshape(1, 1, 1, C2)

    # Folded BatchNorm + ReLU (f32 elementwise on the VPU).
    y = jnp.maximum(x * scale + shift, 0.0)                  # (1, TH, WH, 2Cin)

    # AvgPool2d(2,2), applied BEFORE the 1x1 conv (they commute):
    #  - W-pair add: the two W neighbours sit in the two lane halves.
    cols = y[..., :Cin] + y[..., Cin:]                       # (1, TH, WH, Cin)
    #  - H-pair add: split the leading (untiled) axis -> layout-free reshape.
    pooled = cols.reshape(th2, 2, WH, Cin).sum(axis=1) * 0.25  # (th2, WH, Cin)

    # Dropout: identity at inference.

    # 1x1 conv == channel matmul on the MXU (bf16 operands, f32 accumulation).
    lhs = pooled.reshape(th2 * WH, Cin).astype(jnp.bfloat16)
    z = jnp.dot(lhs, w_ref[...], preferred_element_type=jnp.float32)
    z = z + b_ref[...].astype(jnp.float32)                   # (th2*WH, Cout)

    o_ref[...] = z.reshape(1, th2, WH, z.shape[-1]).astype(o_ref.dtype)


def _pick_block_h(H, W, Cin, bytes_per_elem=2, budget=1 << 20):
    """Largest even divisor of H whose bf16 input block stays under `budget`."""
    best = 2
    for th in range(2, H + 1, 2):
        if H % th != 0:
            continue
        if th * W * Cin * bytes_per_elem <= budget:
            best = th
    return best


def transition_forward(x, gamma, beta, run_mean, run_var, conv_w, conv_b,
                       eps=1e-5, block_h=None, channels_last=False):
    """DenseNet Transition forward.

    x: (N, Cin, H, W) if channels_last=False (PyTorch convention), else
       (N, H, W, Cin). conv_w: (Cout, Cin, 1, 1). Returns the same layout as
       the input (NCHW by default, NHWC if channels_last=True).
    """
    if channels_last:
        x_nhwc = x.astype(jnp.bfloat16)
    else:
        # NCHW -> NHWC, done in bf16 to halve the HBM cost of the layout change.
        # TODO(synk): drop this transpose entirely if the surrounding model is NHWC.
        x_nhwc = jnp.transpose(x.astype(jnp.bfloat16), (0, 2, 3, 1))

    N, H, W, Cin = x_nhwc.shape
    Cout = conv_w.shape[0]
    assert H % 2 == 0 and W % 2 == 0, "AvgPool2d(2,2) expects even H and W"

    # Pack adjacent W columns along the channel/lane axis (free row-major reshape).
    x2 = x_nhwc.reshape(N, H, W // 2, 2 * Cin)

    # Fold BatchNorm (eval mode) into per-channel scale/shift; duplicate for packing.
    scale = (gamma / jnp.sqrt(run_var + eps)).astype(jnp.float32)
    shift = (beta - run_mean * scale).astype(jnp.float32)
    scale2 = jnp.concatenate([scale, scale]).reshape(1, 2 * Cin)
    shift2 = jnp.concatenate([shift, shift]).reshape(1, 2 * Cin)

    # 1x1 conv weight as a (Cin, Cout) bf16 matmul matrix; bias in f32.
    w_mat = conv_w.reshape(Cout, Cin).T.astype(jnp.bfloat16)
    b_mat = conv_b.reshape(1, Cout).astype(jnp.float32)

    th = block_h if block_h is not None else _pick_block_h(H, W, Cin)
    assert th % 2 == 0 and H % th == 0, "block_h must be even and divide H"

    Ho, Wo = H // 2, W // 2
    flops = 2 * N * Ho * Wo * Cin * Cout                    # pool-before-conv FLOPs
    bytes_accessed = (x2.size * 2) + (w_mat.size * 2) + (N * Ho * Wo * Cout * 4)

    out_nhwc = pl.pallas_call(
        _transition_kernel,
        out_shape=jax.ShapeDtypeStruct((N, Ho, Wo, Cout), jnp.float32),
        grid_spec=pltpu.PrefetchScalarGridSpec(
            num_scalar_prefetch=0,
            grid=(N, H // th),
            in_specs=[
                pl.BlockSpec((1, th, Wo, 2 * Cin), lambda n, h: (n, h, 0, 0)),
                pl.BlockSpec((1, 2 * Cin), lambda n, h: (0, 0)),
                pl.BlockSpec((1, 2 * Cin), lambda n, h: (0, 0)),
                pl.BlockSpec((Cin, Cout), lambda n, h: (0, 0)),
                pl.BlockSpec((1, Cout), lambda n, h: (0, 0)),
            ],
            out_specs=pl.BlockSpec((1, th // 2, Wo, Cout),
                                   lambda n, h: (n, h, 0, 0)),
        ),
        compiler_params=pltpu.CompilerParams(
            dimension_semantics=("parallel", "parallel"),
            vmem_limit_bytes=32 * 1024 * 1024,
        ),
        cost_estimate=pl.CostEstimate(
            flops=flops, transcendentals=0, bytes_accessed=bytes_accessed),
    )(x2, scale2, shift2, w_mat, b_mat)

    if channels_last:
        return out_nhwc
    # Output transpose back to NCHW (1/8th the bytes of the input activation).
    return jnp.transpose(out_nhwc, (0, 3, 1, 2)).astype(jnp.float32)


def _reference(x_nchw, gamma, beta, run_mean, run_var, conv_w, conv_b, eps=1e-5):
    # Pure-JAX f32 reference of the same eval-mode forward.
    s = gamma / jnp.sqrt(run_var + eps)
    sh = beta - run_mean * s
    y = x_nchw * s[None, :, None, None] + sh[None, :, None, None]
    y = jnp.maximum(y, 0.0)
    z = jnp.einsum("nchw,oc->nohw", y, conv_w.reshape(conv_w.shape[0], -1))
    z = z + conv_b[None, :, None, None]
    N, Co, H, W = z.shape
    z = z.reshape(N, Co, H // 2, 2, W // 2, 2)
    return z.mean(axis=(3, 5))


if __name__ == "__main__":
    key = jax.random.PRNGKey(0)
    N, Cin, Cout, H, W = 2, 8, 4, 16, 16

    k = jax.random.split(key, 7)
    x = jax.random.normal(k[0], (N, Cin, H, W), dtype=jnp.float32)
    gamma = jax.random.normal(k[1], (Cin,), dtype=jnp.float32) * 0.1 + 1.0
    beta = jax.random.normal(k[2], (Cin,), dtype=jnp.float32) * 0.1
    run_mean = jax.random.normal(k[3], (Cin,), dtype=jnp.float32) * 0.1
    run_var = jnp.abs(jax.random.normal(k[4], (Cin,), dtype=jnp.float32)) + 0.5
    conv_w = jax.random.normal(k[5], (Cout, Cin, 1, 1), dtype=jnp.float32) * 0.1
    conv_b = jax.random.normal(k[6], (Cout,), dtype=jnp.float32) * 0.1

    out = transition_forward(x, gamma, beta, run_mean, run_var, conv_w, conv_b,
                             block_h=8)   # block_h=8 -> grid (2, 2), exercises tiling
    out = jax.block_until_ready(out)

    ref = _reference(x, gamma, beta, run_mean, run_var, conv_w, conv_b)
    assert out.shape == (N, Cout, H // 2, W // 2)
    # bf16 activations / bf16 MXU operands -> compare at bf16-level tolerance.
    assert jnp.allclose(out, ref, atol=2e-2, rtol=2e-2)

    print("KERNEL_OK")
</pallas_src>

<mosaic_0001>
module attributes {stable_mosaic.version = 11 : i64} {
  func.func @_transition_kernel(%arg0: i32, %arg1: i32, %arg2: memref<1x8x8x16xbf16, #tpu.memory_space<vmem>>, %arg3: memref<1x16xf32, #tpu.memory_space<vmem>>, %arg4: memref<1x16xf32, #tpu.memory_space<vmem>>, %arg5: memref<8x4xbf16, #tpu.memory_space<vmem>>, %arg6: memref<1x4xf32, #tpu.memory_space<vmem>>, %arg7: memref<1x4x8x4xf32, #tpu.memory_space<vmem>>) attributes {dimension_semantics = [#tpu.dimension_semantics<parallel>, #tpu.dimension_semantics<parallel>], iteration_bounds = array<i64: 2, 2>, scalar_prefetch = 0 : i64, scratch_operands = 0 : i64, tpu.core_type = #tpu.core_type<tc>, window_params = [{transform_indices = @transform_0, window_bounds = array<i64: 1, 8, 8, 16>}, {pipeline_mode = #tpu.pipeline_mode<synchronous>, transform_indices = @transform_1, window_bounds = array<i64: 1, 16>}, {pipeline_mode = #tpu.pipeline_mode<synchronous>, transform_indices = @transform_2, window_bounds = array<i64: 1, 16>}, {pipeline_mode = #tpu.pipeline_mode<synchronous>, transform_indices = @transform_3, window_bounds = array<i64: 8, 4>}, {pipeline_mode = #tpu.pipeline_mode<synchronous>, transform_indices = @transform_4, window_bounds = array<i64: 1, 4>}, {transform_indices = @transform_5, window_bounds = array<i64: 1, 4, 8, 4>}]} {
    %c0 = arith.constant 0 : index
    %c0_0 = arith.constant 0 : index
    %c0_1 = arith.constant 0 : index
    %c0_2 = arith.constant 0 : index
    %0 = vector.load %arg2[%c0, %c0_0, %c0_1, %c0_2] : memref<1x8x8x16xbf16, #tpu.memory_space<vmem>>, vector<1x8x8x16xbf16>
    %1 = arith.extf %0 : vector<1x8x8x16xbf16> to vector<1x8x8x16xf32>
    %c0_3 = arith.constant 0 : index
    %c0_4 = arith.constant 0 : index
    %2 = vector.load %arg3[%c0_3, %c0_4] : memref<1x16xf32, #tpu.memory_space<vmem>>, vector<1x16xf32>
    %3 = vector.shape_cast %2 : vector<1x16xf32> to vector<1x1x1x16xf32>
    %c0_5 = arith.constant 0 : index
    %c0_6 = arith.constant 0 : index
    %4 = vector.load %arg4[%c0_5, %c0_6] : memref<1x16xf32, #tpu.memory_space<vmem>>, vector<1x16xf32>
    %5 = vector.shape_cast %4 : vector<1x16xf32> to vector<1x1x1x16xf32>
    %6 = vector.broadcast %3 : vector<1x1x1x16xf32> to vector<1x8x8x16xf32>
    %7 = arith.mulf %1, %6 : vector<1x8x8x16xf32>
    %8 = vector.broadcast %5 : vector<1x1x1x16xf32> to vector<1x8x8x16xf32>
    %9 = arith.addf %7, %8 : vector<1x8x8x16xf32>
    %cst = arith.constant 0.000000e+00 : f32
    %10 = vector.broadcast %cst : f32 to vector<1x8x8x16xf32>
    %11 = arith.maximumf %9, %10 : vector<1x8x8x16xf32>
    %12 = vector.extract_strided_slice %11 {offsets = [0, 0, 0, 0], sizes = [1, 8, 8, 8], strides = [1, 1, 1, 1]} : vector<1x8x8x16xf32> to vector<1x8x8x8xf32>
    %13 = vector.extract_strided_slice %11 {offsets = [0, 0, 0, 8], sizes = [1, 8, 8, 8], strides = [1, 1, 1, 1]} : vector<1x8x8x16xf32> to vector<1x8x8x8xf32>
    %14 = arith.addf %12, %13 : vector<1x8x8x8xf32>
    %15 = vector.shape_cast %14 : vector<1x8x8x8xf32> to vector<4x2x8x8xf32>
    %cst_7 = arith.constant dense<0.000000e+00> : vector<4x8x8xf32>
    %16 = vector.multi_reduction <add>, %15, %cst_7 [1] : vector<4x2x8x8xf32> to vector<4x8x8xf32>
    %cst_8 = arith.constant 2.500000e-01 : f32
    %17 = vector.broadcast %cst_8 : f32 to vector<4x8x8xf32>
    %18 = arith.mulf %16, %17 : vector<4x8x8xf32>
    %19 = vector.shape_cast %18 : vector<4x8x8xf32> to vector<32x8xf32>
    %20 = arith.truncf %19 : vector<32x8xf32> to vector<32x8xbf16>
    %c0_9 = arith.constant 0 : index
    %c0_10 = arith.constant 0 : index
    %21 = vector.load %arg5[%c0_9, %c0_10] : memref<8x4xbf16, #tpu.memory_space<vmem>>, vector<8x4xbf16>
    %cst_11 = arith.constant dense<0.000000e+00> : vector<32x4xf32>
    %22 = tpu.matmul %20, %21, %cst_11 {dimension_numbers = #tpu.dot_dimension_numbers<[1], [0], [0], [1], [0, 0, 1, 1], [], []>} : vector<32x8xbf16>, vector<8x4xbf16>, vector<32x4xf32> -> vector<32x4xf32>
    %c0_12 = arith.constant 0 : index
    %c0_13 = arith.constant 0 : index
    %23 = vector.load %arg6[%c0_12, %c0_13] : memref<1x4xf32, #tpu.memory_space<vmem>>, vector<1x4xf32>
    %24 = vector.broadcast %23 : vector<1x4xf32> to vector<32x4xf32>
    %25 = arith.addf %22, %24 : vector<32x4xf32>
    %26 = vector.shape_cast %25 : vector<32x4xf32> to vector<1x4x8x4xf32>
    %c0_14 = arith.constant 0 : index
    %c0_15 = arith.constant 0 : index
    %c0_16 = arith.constant 0 : index
    %c0_17 = arith.constant 0 : index
    %27 = vector.load %arg7[%c0_14, %c0_15, %c0_16, %c0_17] : memref<1x4x8x4xf32, #tpu.memory_space<vmem>>, vector<1x4x8x4xf32>
    tpu.vector_store %arg7[%c0_14, %c0_15, %c0_16, %c0_17], %26 {strides = array<i32>} : memref<1x4x8x4xf32, #tpu.memory_space<vmem>>, vector<1x4x8x4xf32>,
    return
  }
  func.func @transform_0(%arg0: i32, %arg1: i32) -> (i32, i32, i32, i32) {
    %c0_i32 = arith.constant 0 : i32
    %c0_i32_0 = arith.constant 0 : i32
    %c0_i32_1 = arith.constant 0 : i32
    return %arg0, %arg1, %c0_i32, %c0_i32_0 : i32, i32, i32, i32
  }
  func.func @transform_1(%arg0: i32, %arg1: i32) -> (i32, i32) {
    %c0_i32 = arith.constant 0 : i32
    %c0_i32_0 = arith.constant 0 : i32
    %c0_i32_1 = arith.constant 0 : i32
    return %c0_i32, %c0_i32_0 : i32, i32
  }
  func.func @transform_2(%arg0: i32, %arg1: i32) -> (i32, i32) {
    %c0_i32 = arith.constant 0 : i32
    %c0_i32_0 = arith.constant 0 : i32
    %c0_i32_1 = arith.constant 0 : i32
    return %c0_i32, %c0_i32_0 : i32, i32
  }
  func.func @transform_3(%arg0: i32, %arg1: i32) -> (i32, i32) {
    %c0_i32 = arith.constant 0 : i32
    %c0_i32_0 = arith.constant 0 : i32
    %c0_i32_1 = arith.constant 0 : i32
    return %c0_i32, %c0_i32_0 : i32, i32
  }
  func.func @transform_4(%arg0: i32, %arg1: i32) -> (i32, i32) {
    %c0_i32 = arith.constant 0 : i32
    %c0_i32_0 = arith.constant 0 : i32
    %c0_i32_1 = arith.constant 0 : i32
    return %c0_i32, %c0_i32_0 : i32, i32
  }
  func.func @transform_5(%arg0: i32, %arg1: i32) -> (i32, i32, i32, i32) {
    %c0_i32 = arith.constant 0 : i32
    %c0_i32_0 = arith.constant 0 : i32
    %c0_i32_1 = arith.constant 0 : i32
    return %arg0, %arg1, %c0_i32, %c0_i32_0 : i32, i32, i32, i32
  }
}

</mosaic_0001>

<llo_original>
// kernel: tpu_custom_call.1
$region0: #{tpu_custom_call.1}
  #allocation0 [shape = 'u32[]', space=smem, size = 0x4, offset = 0x4, fixed_abs, tag = 'smem constant byte address 0x4 - core index']
  #allocation1 [shape = 'u32[72,128]{1,0:T(1,128)}', space=vmem, size = 0x9000, scoped, tag = 'internal scratch']
  %s0 = inlined_call_operand.hbm [shape: bf16[2,16,8,16], index: 0, kind: input, shape index: {}]
  %s1 = inlined_call_operand.vmem [shape: f32[1,16], index: 1, kind: input, shape index: {}]
  %s2 = inlined_call_operand.vmem [shape: f32[1,16], index: 2, kind: input, shape index: {}]
  %s3 = inlined_call_operand.vmem [shape: bf16[8,4], index: 3, kind: input, shape index: {}]
  %s4 = inlined_call_operand.vmem [shape: f32[1,4], index: 4, kind: input, shape index: {}]
  %s5 = inlined_call_operand.vmem [shape: f32[2,8,8,4], index: 5, kind: output, shape index: {}]
  %s6 = sld [smem:[#allocation0]]
  $region57: #{tpu_custom_call.1} parent=0
    _
  %s8 = ssub.s32 1, %s6
  %s9 = scalar_select 0, %s8, %s6
  $region1: #{tpu_custom_call.1} parent=0
    #allocation2 [shape = 'u8[32768]{0}', space=vmem, size = 0x8000, scoped, tag = 'input window, operand 0']
    #allocation3 [shape = 's32[2]{0}', space=sflag, size = 0x8, scoped, tag = 'scoped memory for tpu_custom_call.1']
    %10 = vsyncpa [#allocation3], 0
    %s11 = scalar_lea.sflag [#allocation3], 1
    %12 = vsyncpa %s11, 0
    loop: start=0, step=1, limit=6
    $region2: #{tpu_custom_call.1} parent=1 // loop_pre_header
      _
    $region3: #{tpu_custom_call.1} parent=1 // loop_header
      %s14 = sphi 0, %s18
      %p15 = scmp.ge.s32.totalorder %s14, 6
      %s21 = sphi 0, %s33
      %s22 = sphi 0, %s29
      %s23 = sphi 0, %s21
      %s24 = sphi 0, %s22
      %s25 = sphi 0, %s23
      %s26 = sphi 0, %s24
      %s38 = sphi 0, %s40
      %s41 = sphi 0, %s38
      %s42 = sphi 0, %s41
      %s58 = sphi 0, %s42
      %s62 = sphi 0, %s62
      %s64 = sphi 0, %s62
      %s65 = sphi 0, %s64
      %s79 = sphi 0, %s65
      %s83 = sphi 0, %s83
      %s85 = sphi 0, %s83
      %s86 = sphi 0, %s85
      %s100 = sphi 0, %s86
      %s104 = sphi 0, %s104
      %s106 = sphi 0, %s104
      %s107 = sphi 0, %s106
      %s121 = sphi 0, %s107
      %s125 = sphi 0, %s125
      %s127 = sphi 0, %s125
      %s128 = sphi 0, %s127
      %s142 = sphi 0, %s128
      %s150 = sphi 0, %s152
      %s153 = sphi 0, %s150
      %s154 = sphi 0, %s153
      %s170 = sphi 0, %s154
    $region4: #{tpu_custom_call.1} parent=1 // loop_header_branch
      %17 = sbr.rel (%p15) target = $region8
    $region5: #{tpu_custom_call.1} parent=1 // loop_body
      %s19 = ssub.s32 %s14, 1
      %s20 = ssub.s32 %s14, 2
      %s27 = sadd.s32 1, %s22
      %p28 = scmp.ge.s32.totalorder %s27, 2
      %s29 = scalar_select %p28, 0, %s27
      %s30 = sadd.s32 1, %s21
      %s31 = scalar_select %p28, %s30, %s21
      %p32 = scmp.ge.s32.totalorder %s31, 2
      %s33 = scalar_select %p32, 0, %s31
      %s34 = ssub.s32 %s21, %s33
      %s35 = ssub.s32 %s22, %s29
      %s36 = sor.u32 %s34, %s35
      %p37 = scmp.eq.s32.totalorder %s36, 0
      %s39 = sadd.s32 %s38, 1
      %s40 = scalar_select %p37, %s38, %s39
      %p43 = pneg %p37
      %p44 = scmp.eq.s32.totalorder %s14, 3
      %p45 = por %p43, %p44
      %p46 = scmp.ne.s32.totalorder %s38, %s41
      %p47 = scmp.eq.s32.totalorder %s14, 0
      %p48 = por %p46, %p47
      %p49 = scmp.ne.s32.totalorder %s38, %s41
      %p50 = scmp.eq.s32.totalorder %s19, 3
      %p51 = por %p49, %p50
      %p52 = scmp.ne.s32.totalorder %s41, %s42
      %p53 = scmp.eq.s32.totalorder %s19, 0
      %p54 = por %p52, %p53
      %p55 = scmp.ne.s32.totalorder %s41, %s42
      %p56 = scmp.eq.s32.totalorder %s20, 3
      %p57 = por %p55, %p56
      %p59 = scmp.ne.s32.totalorder %s42, %s58
      %p60 = scmp.eq.s32.totalorder %s20, 0
      %p61 = por %p59, %p60
      %s63 = sadd.s32 %s62, 1
      %p66 = scmp.eq.s32.totalorder %s14, 3
      %p67 = scmp.ne.s32.totalorder %s62, %s64
      %p68 = scmp.eq.s32.totalorder %s14, 0
      %p69 = por %p67, %p68
      %p70 = scmp.ne.s32.totalorder %s62, %s64
      %p71 = scmp.eq.s32.totalorder %s19, 3
      %p72 = por %p70, %p71
      %p73 = scmp.ne.s32.totalorder %s64, %s65
      %p74 = scmp.eq.s32.totalorder %s19, 0
      %p75 = por %p73, %p74
      %p76 = scmp.ne.s32.totalorder %s64, %s65
      %p77 = scmp.eq.s32.totalorder %s20, 3
      %p78 = por %p76, %p77
      %p80 = scmp.ne.s32.totalorder %s65, %s79
      %p81 = scmp.eq.s32.totalorder %s20, 0
      %p82 = por %p80, %p81
      %s84 = sadd.s32 %s83, 1
      %p87 = scmp.eq.s32.totalorder %s14, 3
      %p88 = scmp.ne.s32.totalorder %s83, %s85
      %p89 = scmp.eq.s32.totalorder %s14, 0
      %p90 = por %p88, %p89
      %p91 = scmp.ne.s32.totalorder %s83, %s85
      %p92 = scmp.eq.s32.totalorder %s19, 3
      %p93 = por %p91, %p92
      %p94 = scmp.ne.s32.totalorder %s85, %s86
      %p95 = scmp.eq.s32.totalorder %s19, 0
      %p96 = por %p94, %p95
      %p97 = scmp.ne.s32.totalorder %s85, %s86
      %p98 = scmp.eq.s32.totalorder %s20, 3
      %p99 = por %p97, %p98
      %p101 = scmp.ne.s32.totalorder %s86, %s100
      %p102 = scmp.eq.s32.totalorder %s20, 0
      %p103 = por %p101, %p102
      %s105 = sadd.s32 %s104, 1
      %p108 = scmp.eq.s32.totalorder %s14, 3
      %p109 = scmp.ne.s32.totalorder %s104, %s106
      %p110 = scmp.eq.s32.totalorder %s14, 0
      %p111 = por %p109, %p110
      %p112 = scmp.ne.s32.totalorder %s104, %s106
      %p113 = scmp.eq.s32.totalorder %s19, 3
      %p114 = por %p112, %p113
      %p115 = scmp.ne.s32.totalorder %s106, %s107
      %p116 = scmp.eq.s32.totalorder %s19, 0
      %p117 = por %p115, %p116
      %p118 = scmp.ne.s32.totalorder %s106, %s107
      %p119 = scmp.eq.s32.totalorder %s20, 3
      %p120 = por %p118, %p119
      %p122 = scmp.ne.s32.totalorder %s107, %s121
      %p123 = scmp.eq.s32.totalorder %s20, 0
      %p124 = por %p122, %p123
      %s126 = sadd.s32 %s125, 1
      %p129 = scmp.eq.s32.totalorder %s14, 3
      %p130 = scmp.ne.s32.totalorder %s125, %s127
      %p131 = scmp.eq.s32.totalorder %s14, 0
      %p132 = por %p130, %p131
      %p133 = scmp.ne.s32.totalorder %s125, %s127
      %p134 = scmp.eq.s32.totalorder %s19, 3
      %p135 = por %p133, %p134
      %p136 = scmp.ne.s32.totalorder %s127, %s128
      %p137 = scmp.eq.s32.totalorder %s19, 0
      %p138 = por %p136, %p137
      %p139 = scmp.ne.s32.totalorder %s127, %s128
      %p140 = scmp.eq.s32.totalorder %s20, 3
      %p141 = por %p139, %p140
      %p143 = scmp.ne.s32.totalorder %s128, %s142
      %p144 = scmp.eq.s32.totalorder %s20, 0
      %p145 = por %p143, %p144
      %s146 = ssub.s32 %s21, %s33
      %s147 = ssub.s32 %s22, %s29
      %s148 = sor.u32 %s146, %s147
      %p149 = scmp.eq.s32.totalorder %s148, 0
      %s151 = sadd.s32 %s150, 1
      %s152 = scalar_select %p149, %s150, %s151
      %p155 = pneg %p149
      %p156 = scmp.eq.s32.totalorder %s14, 3
      %p157 = por %p155, %p156
      %p158 = scmp.ne.s32.totalorder %s150, %s153
      %p159 = scmp.eq.s32.totalorder %s14, 0
      %p160 = por %p158, %p159
      %p161 = scmp.ne.s32.totalorder %s150, %s153
      %p162 = scmp.eq.s32.totalorder %s19, 3
      %p163 = por %p161, %p162
      %p164 = scmp.ne.s32.totalorder %s153, %s154
      %p165 = scmp.eq.s32.totalorder %s19, 0
      %p166 = por %p164, %p165
      %p167 = scmp.ne.s32.totalorder %s153, %s154
      %p168 = scmp.eq.s32.totalorder %s20, 3
      %p169 = por %p167, %p168
      %p171 = scmp.ne.s32.totalorder %s154, %s170
      %p172 = scmp.eq.s32.totalorder %s20, 0
      %p173 = por %p171, %p172
      %p174 = scmp.le.s32.totalorder 1, %s14
      %p175 = scmp.lt.s32.totalorder %s14, 5
      %p176 = pnand %p174, %p175
      %p177 = pneg %p176
      // Predicated region
      $region9: #{tpu_custom_call.1} parent=5 // pred_check
        _
      $region10: #{tpu_custom_call.1} parent=5 // pred_check_branch
        %179 = sbr.rel (%p176) target = $region12
      $region11: #{tpu_custom_call.1} parent=5 // pred_region
        %s180 = ssub.s32 %s14, 1
        // Predicated region
        $region13: #{tpu_custom_call.1} parent=11 // pred_check
          %p181 = pneg %p75
        $region14: #{tpu_custom_call.1} parent=11 // pred_check_branch
          %183 = sbr.rel (%p181) target = $region16
        $region15: #{tpu_custom_call.1} parent=11 // pred_region
          _
        $region16: #{tpu_custom_call.1} parent=11 // pred_fallthru
          _
        // Predicated region
        $region17: #{tpu_custom_call.1} parent=11 // pred_check
          %p184 = pneg %p96
        $region18: #{tpu_custom_call.1} parent=11 // pred_check_branch
          %186 = sbr.rel (%p184) target = $region20
        $region19: #{tpu_custom_call.1} parent=11 // pred_region
          _
        $region20: #{tpu_custom_call.1} parent=11 // pred_fallthru
          _
        // Predicated region
        $region21: #{tpu_custom_call.1} parent=11 // pred_check
          %p187 = pneg %p117
        $region22: #{tpu_custom_call.1} parent=11 // pred_check_branch
          %189 = sbr.rel (%p187) target = $region24
        $region23: #{tpu_custom_call.1} parent=11 // pred_region
          _
        $region24: #{tpu_custom_call.1} parent=11 // pred_fallthru
          _
        // Predicated region
        $region25: #{tpu_custom_call.1} parent=11 // pred_check
          %p190 = pneg %p138
        $region26: #{tpu_custom_call.1} parent=11 // pred_check_branch
          %192 = sbr.rel (%p190) target = $region28
        $region27: #{tpu_custom_call.1} parent=11 // pred_region
          _
        $region28: #{tpu_custom_call.1} parent=11 // pred_fallthru
          _
      $region12: #{tpu_custom_call.1} parent=5 // pred_fallthru
        _
      %p193 = scmp.lt.s32.totalorder %s14, 4
      // Predicated region
      $region29: #{tpu_custom_call.1} parent=5 // pred_check
        %p194 = pneg %p193
      $region30: #{tpu_custom_call.1} parent=5 // pred_check_branch
        %196 = sbr.rel (%p194) target = $region32
      $region31: #{tpu_custom_call.1} parent=5 // pred_region
        // Predicated region
        $region33: #{tpu_custom_call.1} parent=31 // pred_check
          %p197 = pneg %p48
        $region34: #{tpu_custom_call.1} parent=31 // pred_check_branch
          %199 = sbr.rel (%p197) target = $region36
        $region35: #{tpu_custom_call.1} parent=31 // pred_region
          %s200 = sand.u32 %s38, 1
          %s201 = scalar_lea.sflag [#allocation3], %s200
          %s202 = sand.u32 %s38, 1
          %s203 = smul.addr %s202, 32
          %s204 = scalar_lea.vmem [#allocation2], %s203
          %s205 = smul.u32 8, %s22
          %207 = vsyncadd %s201, 0
          %s208 = smul.addr %s21, 16
          %s209 = sadd.s32 %s205, %s208
          %s210 = smul.addr %s209, 4
          %s211 = scalar_lea.hbm %s0, %s210
          %s212 = sshll.u32 %s211, 4
          %s213 = int_to_ptr.hbm [resolvable:$true] %s212
          %s214 = sshll.u32 %s204, 4
          %s215 = int_to_ptr.vmem [resolvable:$true] %s214
          %220 = dma.hbm_to_vmem [thread:$0]  %s213, 512, %s215, %s201, 64, 64, 4
        $region36: #{tpu_custom_call.1} parent=31 // pred_fallthru
          _
      $region32: #{tpu_custom_call.1} parent=5 // pred_fallthru
        _
      %p221 = scmp.le.s32.totalorder 1, %s14
      %p222 = scmp.lt.s32.totalorder %s14, 5
      %p223 = pnand %p221, %p222
      %p224 = pneg %p223
      // Predicated region
      $region37: #{tpu_custom_call.1} parent=5 // pred_check
        _
      $region38: #{tpu_custom_call.1} parent=5 // pred_check_branch
        %226 = sbr.rel (%p223) target = $region40
      $region39: #{tpu_custom_call.1} parent=5 // pred_region
        %s227 = ssub.s32 %s14, 1
        %s228 = sand.u32 %s41, 1
        %s229 = scalar_lea.sflag [#allocation3], %s228
        %s230 = sand.u32 %s41, 1
        %s231 = smul.addr %s230, 32
        %s232 = scalar_lea.vmem [#allocation2], %s231
        // Predicated region
        $region41: #{tpu_custom_call.1} parent=39 // pred_check
          %p233 = pneg %p54
        $region42: #{tpu_custom_call.1} parent=39 // pred_check_branch
          %235 = sbr.rel (%p233) target = $region44
        $region43: #{tpu_custom_call.1} parent=39 // pred_region
          %237 = dma.done %s229, 512
        $region44: #{tpu_custom_call.1} parent=39 // pred_fallthru
          _
        %s238 = sand.u32 %s41, 1
        %s239 = scalar_lea.sflag [#allocation3], %s238
        %s240 = sand.u32 %s41, 1
        %s241 = smul.addr %s240, 32
        %s242 = scalar_lea.vmem [#allocation2], %s241
        %p243 = pneg %p54
        %p244 = pneg %p51
        %p245 = pneg %p75
        %p246 = pneg %p72
        %p247 = pneg %p96
        %p248 = pneg %p93
        %p249 = pneg %p117
        %p250 = pneg %p114
        %p251 = pneg %p138
        %p252 = pneg %p135
        %p253 = pneg %p166
        %p254 = pneg %p163
        %s255 = smul.u32 4, %s24
        %p256 = scmp.lt.s32.totalorder %s23, 1
        %s257 = scalar_select %p256, %s23, 1
        %p258 = scmp.lt.s32.totalorder %s255, 7
        %s259 = scalar_select %p258, %s255, 7
        %s260 = smul.addr %s257, 8
        %s261 = sadd.s32 %s259, %s260
        %s262 = smul.addr %s261, 8
        %s263 = scalar_lea.vmem %s5, %s262
        %s264 = smul.u32 8, %s24
        %s265 = smul.u32 4, %s24
        %p266 = scmp.lt.s32.totalorder %s23, 1
        %s267 = scalar_select %p266, %s23, 1
        %p268 = scmp.lt.s32.totalorder %s265, 7
        %s269 = scalar_select %p268, %s265, 7
        %s270 = smul.addr %s267, 8
        %s271 = sadd.s32 %s269, %s270
        %s272 = smul.addr %s271, 8
        %s273 = scalar_lea.vmem %s5, %s272
        %s274 = smul.u32 4, %s24
        %v276 = vld [vmem:[%s232] sm:$0xf]
        %v277 = vld [vmem:[%s232 + $0x4] sm:$0xf]
        %v278 = vld [vmem:[%s232 + $0x8] sm:$0xf]
        %v279 = vld [vmem:[%s232 + $0xc] sm:$0xf]
        %v280 = vld [vmem:[%s232 + $0x10] sm:$0xf]
        %v281 = vld [vmem:[%s232 + $0x14] sm:$0xf]
        %v282 = vld [vmem:[%s232 + $0x18] sm:$0xf]
        %v283 = vld [vmem:[%s232 + $0x1c] sm:$0xf]
        %v284 = vunpack.c.l.bf16 %v276
        %v285 = vunpack.c.l.bf16 %v277
        %v286 = vunpack.c.l.bf16 %v278
        %v287 = vunpack.c.l.bf16 %v279
        %v288 = vunpack.c.l.bf16 %v280
        %v289 = vunpack.c.l.bf16 %v281
        %v290 = vunpack.c.l.bf16 %v282
        %v291 = vunpack.c.l.bf16 %v283
        %v292 = vld [vmem:[%s1] sm:$0x1]
        %v293 = vld [vmem:[%s2] sm:$0x1]
        %v295 = vperm.slane %v292, 0
        %v297 = vmul.f32 %v284, %v295
        %v298 = vmul.f32 %v285, %v295
        %v299 = vmul.f32 %v286, %v295
        %v300 = vmul.f32 %v287, %v295
        %v301 = vmul.f32 %v288, %v295
        %v302 = vmul.f32 %v289, %v295
        %v303 = vmul.f32 %v290, %v295
        %v304 = vmul.f32 %v291, %v295
        %v306 = vperm.slane %v293, 0
        %v308 = vadd.f32 %v297, %v306
        %v309 = vadd.f32 %v298, %v306
        %v310 = vadd.f32 %v299, %v306
        %v311 = vadd.f32 %v300, %v306
        %v312 = vadd.f32 %v301, %v306
        %v313 = vadd.f32 %v302, %v306
        %v314 = vadd.f32 %v303, %v306
        %v315 = vadd.f32 %v304, %v306
        %v316 = vmax.f32 %v308, 0.0
        %v317 = vmax.f32 %v309, 0.0
        %v318 = vmax.f32 %v310, 0.0
        %v319 = vmax.f32 %v311, 0.0
        %v320 = vmax.f32 %v312, 0.0
        %v321 = vmax.f32 %v313, 0.0
        %v322 = vmax.f32 %v314, 0.0
        %v323 = vmax.f32 %v315, 0.0
        %332 = vrot.lane.b32.xlu0 %v316, 120
        %v333 = vpop.permute.xlu0 %332
        %334 = vrot.lane.b32.xlu0 %v317, 120
        %v335 = vpop.permute.xlu0 %334
        %336 = vrot.lane.b32.xlu0 %v318, 120
        %v337 = vpop.permute.xlu0 %336
        %338 = vrot.lane.b32.xlu0 %v319, 120
        %v339 = vpop.permute.xlu0 %338
        %340 = vrot.lane.b32.xlu0 %v320, 120
        %v341 = vpop.permute.xlu0 %340
        %342 = vrot.lane.b32.xlu0 %v321, 120
        %v343 = vpop.permute.xlu0 %342
        %344 = vrot.lane.b32.xlu0 %v322, 120
        %v345 = vpop.permute.xlu0 %344
        %346 = vrot.lane.b32.xlu0 %v323, 120
        %v347 = vpop.permute.xlu0 %346
        %v356 = vadd.f32 %v316, %v333
        %v357 = vadd.f32 %v317, %v335
        %v358 = vadd.f32 %v318, %v337
        %v359 = vadd.f32 %v319, %v339
        %v360 = vadd.f32 %v320, %v341
        %v361 = vadd.f32 %v321, %v343
        %v362 = vadd.f32 %v322, %v345
        %v363 = vadd.f32 %v323, %v347
        %vm364 = vcmask 64512
        %v365 = vsel %vm364, %v356, 0.0
        %v366 = vsel %vm364, %v357, 0.0
        %v367 = vadd.f32 %v365, %v366
        %v368 = vsel %vm364, %v358, 0.0
        %v369 = vsel %vm364, %v359, 0.0
        %v370 = vadd.f32 %v368, %v369
        %v371 = vsel %vm364, %v360, 0.0
        %v372 = vsel %vm364, %v361, 0.0
        %v373 = vadd.f32 %v371, %v372
        %v374 = vsel %vm364, %v362, 0.0
        %v375 = vsel %vm364, %v363, 0.0
        %v376 = vadd.f32 %v374, %v375
        %v377 = vmul.f32 %v367, 0.25
        %v378 = vmul.f32 %v370, 0.25
        %v379 = vmul.f32 %v373, 0.25
        %v380 = vmul.f32 %v376, 0.25
        %v381 = vpack.c.bf16 %v378, %v377
        %v382 = vpack.c.bf16 %v380, %v379
        %v383 = vld [vmem:[%s3] sm:$0xf]
        %v384 = vld [vmem:[%s4] sm:$0x1]
        %v386 = vperm.slane %v384, 0
        %v389 = vsel %vm364, %v381, 0
        %v392 = vsel %vm364, %v382, 0
        %vm394 = vcmask 1043456
        %v396 = vsel %vm394, %v383, 0
        %398 = vmatpush.bf16.msra.mxu0 0
        %399 = vmatpush.bf16.msra.mxu0 0
        %400 = vmatpush.bf16.msra.mxu0 0
        %401 = vmatpush.bf16.msra.mxu0 0
        %402 = vmatpush.bf16.msra.mxu0 0
        %403 = vmatpush.bf16.msra.mxu0 0
        %404 = vmatpush.bf16.msra.mxu0 0
        %405 = vmatpush.bf16.msra.mxu0 %v396
        %406 = vmatmul.bf16.gmra.mxu0 %v389
        %v407 = vpop.f32.mrf.mxu0
        %v408 = vadd.f32 %v386, %v407
        %v409 = vpop.f32.mrf.mxu0
        %v410 = vadd.f32 %v386, %v409
        %411 = vmatmul.bf16.gmra.mxu0 %v392
        %v412 = vpop.f32.mrf.mxu0
        %v413 = vadd.f32 %v386, %v412
        %v414 = vpop.f32.mrf.mxu0
        %v415 = vadd.f32 %v386, %v414
        %416 = vdwg.mxu0
        %vm417 = vcmask 31744
        %418 = vst.msk [vmem:[%s273] sm:$0xff] %vm417, %v408
        %419 = vst.msk [vmem:[%s273 + $0x8] sm:$0xff] %vm417, %v410
        %420 = vst.msk [vmem:[%s273 + $0x10] sm:$0xff] %vm417, %v413
        %421 = vst.msk [vmem:[%s273 + $0x18] sm:$0xff] %vm417, %v415
        %s422 = smul.u32 4, %s24
        %p423 = scmp.lt.s32.totalorder %s23, 1
        %s424 = scalar_select %p423, %s23, 1
        %p425 = scmp.lt.s32.totalorder %s422, 7
        %s426 = scalar_select %p425, %s422, 7
        %s427 = smul.addr %s424, 8
        %s428 = sadd.s32 %s426, %s427
        %s429 = smul.addr %s428, 8
        %s430 = scalar_lea.vmem %s5, %s429
        // Predicated region
        $region45: #{tpu_custom_call.1} parent=39 // pred_check
          %p431 = pneg %p163
        $region46: #{tpu_custom_call.1} parent=39 // pred_check_branch
          %433 = sbr.rel (%p431) target = $region48
        $region47: #{tpu_custom_call.1} parent=39 // pred_region
          %s434 = smul.u32 4, %s24
        $region48: #{tpu_custom_call.1} parent=39 // pred_fallthru
          _
      $region40: #{tpu_custom_call.1} parent=5 // pred_fallthru
        _
      %p435 = scmp.le.s32.totalorder 2, %s14
      // Predicated region
      $region49: #{tpu_custom_call.1} parent=5 // pred_check
        %p436 = pneg %p435
      $region50: #{tpu_custom_call.1} parent=5 // pred_check_branch
        %438 = sbr.rel (%p436) target = $region52
      $region51: #{tpu_custom_call.1} parent=5 // pred_region
        %s439 = ssub.s32 %s14, 2
        // Predicated region
        $region53: #{tpu_custom_call.1} parent=51 // pred_check
          %p440 = pneg %p169
        $region54: #{tpu_custom_call.1} parent=51 // pred_check_branch
          %442 = sbr.rel (%p440) target = $region56
        $region55: #{tpu_custom_call.1} parent=51 // pred_region
          %s443 = smul.u32 4, %s26
          %p444 = scmp.lt.s32.totalorder %s25, 1
          %s445 = scalar_select %p444, %s25, 1
          %p446 = scmp.lt.s32.totalorder %s443, 7
          %s447 = scalar_select %p446, %s443, 7
          %s448 = smul.addr %s445, 8
          %s449 = sadd.s32 %s447, %s448
          %s450 = smul.addr %s449, 8
          %s451 = scalar_lea.vmem %s5, %s450
        $region56: #{tpu_custom_call.1} parent=51 // pred_fallthru
          _
      $region52: #{tpu_custom_call.1} parent=5 // pred_fallthru
        _
    $region6: #{tpu_custom_call.1} parent=1 // loop_footer
      %s18 = sadd.s32 1, %s14
    $region7: #{tpu_custom_call.1} parent=1 // loop_footer_branch
      %13 = sbr.rel target = $region3
    $region8: #{tpu_custom_call.1} parent=1 // loop_exit
      _
    %452 = vsyncpa [#allocation3], 1
    %s453 = scalar_lea.sflag [#allocation3], 1
    %454 = vsyncpa %s453, 1

</llo_original>
